<compile_context>
chip_gen: v7x
topology: tpu7x:2x2x1
jax: 0.10.0
libtpu: 0.0.40
codegen_flags: <defaults>
</compile_context>

<pallas_src>
import functools

import numpy as np
import jax
import jax.numpy as jnp
from jax.experimental import pallas as pl
from jax.experimental.pallas import tpu as pltpu


def _norm_kernel(x_ref, alpha_ref, bias_ref, o_ref, *, eps: float, d_model: int):
    # x_ref: (TR, D) row tile; alpha_ref/bias_ref: (1, D), broadcast over rows.
    x = x_ref[...].astype(jnp.float32)
    mean = jnp.mean(x, axis=-1, keepdims=True)
    xc = x - mean
    # torch.std default is the unbiased estimator: divide by (D - 1).
    var = jnp.sum(xc * xc, axis=-1, keepdims=True) * (1.0 / (d_model - 1))
    inv = 1.0 / (jnp.sqrt(var) + eps)          # eps on std, matching the module
    out = alpha_ref[...].astype(jnp.float32) * (xc * inv) + bias_ref[...].astype(jnp.float32)
    o_ref[...] = out.astype(o_ref.dtype)


def _round_up(n: int, m: int) -> int:
    return (n + m - 1) // m * m


def _choose_row_tile(n_rows: int, d_model: int, itemsize: int) -> int:
    """Row-tile size: ~2 MiB blocks (cap 4 MiB), multiple of 8, <= padded rows."""
    target_rows = (2 * 1024 * 1024) // max(1, d_model * itemsize)
    max_rows = (4 * 1024 * 1024) // max(1, d_model * itemsize)
    tr = max(8, min(target_rows, max_rows))
    tr = max(8, (tr // 8) * 8)
    tr = min(tr, _round_up(n_rows, 8))
    return tr


def norm_forward(x: jax.Array, alpha: jax.Array, bias: jax.Array, eps: float = 1e-6) -> jax.Array:
    """Norm.forward over the last axis of x (any leading shape)."""
    orig_shape = x.shape
    d_model = orig_shape[-1]
    assert alpha.shape == (d_model,) and bias.shape == (d_model,)

    n_rows = 1
    for s in orig_shape[:-1]:
        n_rows *= s
    x2 = x.reshape(n_rows, d_model)

    tr = _choose_row_tile(n_rows, d_model, x2.dtype.itemsize)
    n_rows_pad = _round_up(n_rows, tr)
    if n_rows_pad != n_rows:
        # Zero pad rows normalize to 0 / (0 + eps) = 0 -> no NaNs; dropped below.
        x2 = jnp.pad(x2, ((0, n_rows_pad - n_rows), (0, 0)))

    alpha2 = alpha.reshape(1, d_model)
    bias2 = bias.reshape(1, d_model)

    kernel = functools.partial(_norm_kernel, eps=float(eps), d_model=d_model)

    out = pl.pallas_call(
        kernel,
        out_shape=jax.ShapeDtypeStruct((n_rows_pad, d_model), x.dtype),
        grid_spec=pltpu.PrefetchScalarGridSpec(
            num_scalar_prefetch=0,
            grid=(n_rows_pad // tr,),
            in_specs=[
                pl.BlockSpec((tr, d_model), lambda r: (r, 0)),
                pl.BlockSpec((1, d_model), lambda r: (0, 0)),   # alpha: resident, no re-DMA
                pl.BlockSpec((1, d_model), lambda r: (0, 0)),   # bias:  resident, no re-DMA
            ],
            out_specs=pl.BlockSpec((tr, d_model), lambda r: (r, 0)),
        ),
        compiler_params=pltpu.CompilerParams(
            dimension_semantics=("parallel",),                  # megacore-shardable row tiles
            vmem_limit_bytes=32 * 1024 * 1024,                  # 2x2x(<=4 MiB) + params << 32 MiB
        ),
    )(x2, alpha2, bias2)

    if n_rows_pad != n_rows:
        out = out[:n_rows]
    return out.reshape(orig_shape)


if __name__ == "__main__":
    # Small, module-consistent shapes: batch=2, seq=8, d_model=32.
    B, S, D = 2, 8, 32
    eps = 1e-6

    key = jax.random.PRNGKey(0)
    kx, ka, kb = jax.random.split(key, 3)
    x = jax.random.normal(kx, (B, S, D), dtype=jnp.float32)
    # Module inits alpha=1, bias=0; use non-trivial values to exercise the affine path.
    alpha = 1.0 + 0.1 * jax.random.normal(ka, (D,), dtype=jnp.float32)
    bias = 0.1 * jax.random.normal(kb, (D,), dtype=jnp.float32)

    out = norm_forward(x, alpha, bias, eps=eps)
    out = jax.block_until_ready(out)

    # Pure-JAX reference matching PyTorch semantics (unbiased std, eps on std).
    mean = x.mean(axis=-1, keepdims=True)
    std = jnp.std(x, axis=-1, keepdims=True, ddof=1)
    ref = alpha * (x - mean) / (std + eps) + bias
    np.testing.assert_allclose(np.asarray(out), np.asarray(ref), rtol=1e-5, atol=1e-5)

    print("KERNEL_OK")
</pallas_src>

<mosaic_0001>
module attributes {stable_mosaic.version = 11 : i64} {
  func.func @_norm_kernel(%arg0: i32, %arg1: memref<16x32xf32, #tpu.memory_space<vmem>>, %arg2: memref<1x32xf32, #tpu.memory_space<vmem>>, %arg3: memref<1x32xf32, #tpu.memory_space<vmem>>, %arg4: memref<16x32xf32, #tpu.memory_space<vmem>>) attributes {dimension_semantics = [#tpu.dimension_semantics<parallel>], iteration_bounds = array<i64: 1>, scalar_prefetch = 0 : i64, scratch_operands = 0 : i64, tpu.core_type = #tpu.core_type<tc>, window_params = [{transform_indices = @transform_0, window_bounds = array<i64: 16, 32>}, {pipeline_mode = #tpu.pipeline_mode<synchronous>, transform_indices = @transform_1, window_bounds = array<i64: 1, 32>}, {pipeline_mode = #tpu.pipeline_mode<synchronous>, transform_indices = @transform_2, window_bounds = array<i64: 1, 32>}, {transform_indices = @transform_3, window_bounds = array<i64: 16, 32>}]} {
    %c0 = arith.constant 0 : index
    %c0_0 = arith.constant 0 : index
    %0 = vector.load %arg1[%c0, %c0_0] : memref<16x32xf32, #tpu.memory_space<vmem>>, vector<16x32xf32>
    %cst = arith.constant dense<0.000000e+00> : vector<16xf32>
    %1 = vector.multi_reduction <add>, %0, %cst [1] : vector<16x32xf32> to vector<16xf32>
    %2 = vector.shape_cast %1 : vector<16xf32> to vector<16x1xf32>
    %cst_1 = arith.constant 3.200000e+01 : f32
    %3 = vector.broadcast %cst_1 : f32 to vector<16x1xf32>
    %4 = arith.divf %2, %3 : vector<16x1xf32>
    %5 = vector.broadcast %4 : vector<16x1xf32> to vector<16x32xf32>
    %6 = arith.subf %0, %5 : vector<16x32xf32>
    %7 = arith.mulf %6, %6 : vector<16x32xf32>
    %cst_2 = arith.constant dense<0.000000e+00> : vector<16xf32>
    %8 = vector.multi_reduction <add>, %7, %cst_2 [1] : vector<16x32xf32> to vector<16xf32>
    %9 = vector.shape_cast %8 : vector<16xf32> to vector<16x1xf32>
    %cst_3 = arith.constant 0.0322580636 : f32
    %10 = vector.broadcast %cst_3 : f32 to vector<16x1xf32>
    %11 = arith.mulf %9, %10 : vector<16x1xf32>
    %12 = math.sqrt %11 : vector<16x1xf32>
    %cst_4 = arith.constant 9.99999997E-7 : f32
    %13 = vector.broadcast %cst_4 : f32 to vector<16x1xf32>
    %14 = arith.addf %12, %13 : vector<16x1xf32>
    %cst_5 = arith.constant 1.000000e+00 : f32
    %15 = vector.broadcast %cst_5 : f32 to vector<16x1xf32>
    %16 = arith.divf %15, %14 : vector<16x1xf32>
    %c0_6 = arith.constant 0 : index
    %c0_7 = arith.constant 0 : index
    %17 = vector.load %arg2[%c0_6, %c0_7] : memref<1x32xf32, #tpu.memory_space<vmem>>, vector<1x32xf32>
    %18 = vector.broadcast %16 : vector<16x1xf32> to vector<16x32xf32>
    %19 = arith.mulf %6, %18 : vector<16x32xf32>
    %20 = vector.broadcast %17 : vector<1x32xf32> to vector<16x32xf32>
    %21 = arith.mulf %20, %19 : vector<16x32xf32>
    %c0_8 = arith.constant 0 : index
    %c0_9 = arith.constant 0 : index
    %22 = vector.load %arg3[%c0_8, %c0_9] : memref<1x32xf32, #tpu.memory_space<vmem>>, vector<1x32xf32>
    %23 = vector.broadcast %22 : vector<1x32xf32> to vector<16x32xf32>
    %24 = arith.addf %21, %23 : vector<16x32xf32>
    %c0_10 = arith.constant 0 : index
    %c0_11 = arith.constant 0 : index
    %25 = vector.load %arg4[%c0_10, %c0_11] : memref<16x32xf32, #tpu.memory_space<vmem>>, vector<16x32xf32>
    tpu.vector_store %arg4[%c0_10, %c0_11], %24 {strides = array<i32>} : memref<16x32xf32, #tpu.memory_space<vmem>>, vector<16x32xf32>,
    return
  }
  func.func @transform_0(%arg0: i32) -> (i32, i32) {
    %c0_i32 = arith.constant 0 : i32
    %c0_i32_0 = arith.constant 0 : i32
    return %arg0, %c0_i32 : i32, i32
  }
  func.func @transform_1(%arg0: i32) -> (i32, i32) {
    %c0_i32 = arith.constant 0 : i32
    %c0_i32_0 = arith.constant 0 : i32
    %c0_i32_1 = arith.constant 0 : i32
    return %c0_i32, %c0_i32_0 : i32, i32
  }
  func.func @transform_2(%arg0: i32) -> (i32, i32) {
    %c0_i32 = arith.constant 0 : i32
    %c0_i32_0 = arith.constant 0 : i32
    %c0_i32_1 = arith.constant 0 : i32
    return %c0_i32, %c0_i32_0 : i32, i32
  }
  func.func @transform_3(%arg0: i32) -> (i32, i32) {
    %c0_i32 = arith.constant 0 : i32
    %c0_i32_0 = arith.constant 0 : i32
    return %arg0, %c0_i32 : i32, i32
  }
}

</mosaic_0001>

<llo_original>
// kernel: tpu_custom_call.1
$region0: #{tpu_custom_call.1}
  #allocation0 [shape = 'u32[]', space=smem, size = 0x4, offset = 0x4, fixed_abs, tag = 'smem constant byte address 0x4 - core index']
  #allocation1 [shape = 'u32[144,128]{1,0:T(1,128)}', space=vmem, size = 0x12000, scoped, tag = 'internal scratch']
  %s0 = inlined_call_operand.hbm [shape: f32[16,32], index: 0, kind: input, shape index: {}]
  %s1 = inlined_call_operand.vmem [shape: f32[1,32], index: 1, kind: input, shape index: {}]
  %s2 = inlined_call_operand.vmem [shape: f32[1,32], index: 2, kind: input, shape index: {}]
  %s3 = inlined_call_operand.hbm [shape: f32[16,32], index: 3, kind: output, shape index: {}]
  %s4 = sld [smem:[#allocation0]]
  $region26: #{tpu_custom_call.1} parent=0
    _
  %s6 = ssub.s32 1, %s4
  %s7 = scalar_select 0, %s6, %s4
  $region1: #{tpu_custom_call.1} parent=0
    #allocation2 [shape = 'u8[8192]{0}', space=vmem, size = 0x2000, scoped, tag = 'input window, operand 0, single buffered']
    #allocation3 [shape = 's32[1]{0}', space=sflag, size = 0x4, scoped, tag = 'scoped memory for tpu_custom_call.1']
    #allocation4 [shape = 's32[1]{0}', space=sflag, size = 0x4, scoped, tag = 'scoped memory for tpu_custom_call.1']
    #allocation5 [shape = 'u8[8192]{0}', space=vmem, size = 0x2000, scoped, tag = 'output window, operand 0, single buffered']
    %8 = vsyncpa [#allocation3], 0
    %9 = vsyncpa [#allocation4], 0
    // Predicated region
    $region2: #{tpu_custom_call.1} parent=1 // pred_check
      _
    $region3: #{tpu_custom_call.1} parent=1 // pred_check_branch
      %11 = sbr.rel (0) target = $region5
    $region4: #{tpu_custom_call.1} parent=1 // pred_region
      %s13 = ssub.s32 256, 256
      %14 = vsyncadd [#allocation3], %s13
      %s15 = sshll.u32 [#allocation2], 4
      %s16 = int_to_ptr.vmem [resolvable:$true] %s15
      %21 = dma.hbm_to_vmem [thread:$0]  %s0, 256, %s16, [#allocation3], 128, 128, 8
    $region5: #{tpu_custom_call.1} parent=1 // pred_fallthru
      _
    // Predicated region
    $region6: #{tpu_custom_call.1} parent=1 // pred_check
      _
    $region7: #{tpu_custom_call.1} parent=1 // pred_check_branch
      %23 = sbr.rel (0) target = $region9
    $region8: #{tpu_custom_call.1} parent=1 // pred_region
      _
    $region9: #{tpu_custom_call.1} parent=1 // pred_fallthru
      _
    // Predicated region
    $region10: #{tpu_custom_call.1} parent=1 // pred_check
      _
    $region11: #{tpu_custom_call.1} parent=1 // pred_check_branch
      %25 = sbr.rel (0) target = $region13
    $region12: #{tpu_custom_call.1} parent=1 // pred_region
      _
    $region13: #{tpu_custom_call.1} parent=1 // pred_fallthru
      _
    // Predicated region
    $region14: #{tpu_custom_call.1} parent=1 // pred_check
      _
    $region15: #{tpu_custom_call.1} parent=1 // pred_check_branch
      %27 = sbr.rel (0) target = $region17
    $region16: #{tpu_custom_call.1} parent=1 // pred_region
      %28 = dma.done [#allocation3], 256
    $region17: #{tpu_custom_call.1} parent=1 // pred_fallthru
      _
    %v29 = vld [vmem:[#allocation2] sm:$0xff]
    %v30 = vld [vmem:[#allocation2 + $0x8] sm:$0xff]
    %vm31 = vcmask 261120
    %v32 = vsel %vm31, %v29, 0.0
    %33 = vadd.xlane.f32.xlu0 %v32
    %v34 = vpop.xlane.xlu0 %33
    %v35 = vsel %vm31, %v30, 0.0
    %36 = vadd.xlane.f32.xlu0 %v35
    %v37 = vpop.xlane.xlu0 %36
    %v38 = vrcp.pop 32.0
    %v39 = vmul.f32 %v34, %v38
    %v40 = vmul.f32 %v37, %v38
    %v41 = vsub.f32 %v29, %v39
    %v42 = vsub.f32 %v30, %v40
    %v43 = vmul.f32 %v41, %v41
    %v44 = vmul.f32 %v42, %v42
    %v45 = vsel %vm31, %v43, 0.0
    %46 = vadd.xlane.f32.xlu0 %v45
    %v47 = vpop.xlane.xlu0 %46
    %v48 = vsel %vm31, %v44, 0.0
    %49 = vadd.xlane.f32.xlu0 %v48
    %v50 = vpop.xlane.xlu0 %49
    %v51 = vmul.f32 %v47, 0.032258064
    %v52 = vmul.f32 %v50, 0.032258064
    %v53 = vrsqrt.pop %v51
    %v54 = vmul.f32 %v51, %v53
    %vm55 = vcmp.eq.f32.partialorder %v51, inf
    %v56 = vsel %vm55, %v51, %v54
    %vm57 = vcmp.eq.f32.partialorder %v51, 0.0
    %v58 = vand.u32 %v51, 2147483648
    %v59 = vsel %vm57, %v58, %v56
    %v60 = vrsqrt.pop %v52
    %v61 = vmul.f32 %v52, %v60
    %vm62 = vcmp.eq.f32.partialorder %v52, inf
    %v63 = vsel %vm62, %v52, %v61
    %vm64 = vcmp.eq.f32.partialorder %v52, 0.0
    %v65 = vand.u32 %v52, 2147483648
    %v66 = vsel %vm64, %v65, %v63
    %v67 = vadd.f32 %v59, 1e-06
    %v68 = vadd.f32 %v66, 1e-06
    %v69 = vrcp.pop %v67
    %v70 = vmul.f32 1.0, %v69
    %v71 = vrcp.pop %v68
    %v72 = vmul.f32 1.0, %v71
    %v73 = vld [vmem:[%s1] sm:$0x1]
    %v74 = vmul.f32 %v41, %v70
    %v75 = vmul.f32 %v42, %v72
    %v77 = vlaneseq
    %v78 = vshrl.u32 %v77, 7
    %v79 = vsub.s32 0, %v78
    %v80 = vrot.slane %v73, %v79
    %v82 = vmul.f32 %v80, %v74
    %v83 = vmul.f32 %v80, %v75
    %v84 = vld [vmem:[%s2] sm:$0x1]
    %v86 = vlaneseq
    %v87 = vshrl.u32 %v86, 7
    %v88 = vsub.s32 0, %v87
    %v89 = vrot.slane %v84, %v88
    %v91 = vadd.f32 %v82, %v89
    %v92 = vadd.f32 %v83, %v89
    %93 = vst.msk [vmem:[#allocation5] sm:$0xff] %vm31, %v91
    %94 = vst.msk [vmem:[#allocation5 + $0x8] sm:$0xff] %vm31, %v92
    // Predicated region
    $region18: #{tpu_custom_call.1} parent=1 // pred_check
      _
    $region19: #{tpu_custom_call.1} parent=1 // pred_check_branch
      %96 = sbr.rel (0) target = $region21
    $region20: #{tpu_custom_call.1} parent=1 // pred_region
      %s98 = ssub.s32 256, 256
      %99 = vsyncadd [#allocation4], %s98
      %s100 = sshll.u32 [#allocation5], 4
      %s101 = int_to_ptr.vmem [resolvable:$true] %s100
      %106 = dma.vmem_to_hbm [thread:$0]  %s101, 256, %s3, [#allocation4], 128, 128, 8
    $region21: #{tpu_custom_call.1} parent=1 // pred_fallthru
      _
    // Predicated region
    $region22: #{tpu_custom_call.1} parent=1 // pred_check
      _
    $region23: #{tpu_custom_call.1} parent=1 // pred_check_branch
      %108 = sbr.rel (0) target = $region25
    $region24: #{tpu_custom_call.1} parent=1 // pred_region
      %109 = dma.done [#allocation4], 256
    $region25: #{tpu_custom_call.1} parent=1 // pred_fallthru
      _
    %110 = vsyncpa [#allocation3], 1
    %111 = vsyncpa [#allocation4], 1

</llo_original>
